<compile_context>
chip_gen: v7x
topology: tpu7x:2x2x1
jax: 0.10.0
libtpu: 0.0.40
codegen_flags: <defaults>
</compile_context>

<pallas_src>
import jax
import jax.numpy as jnp
from jax.experimental import pallas as pl
from jax.experimental.pallas import tpu as pltpu

SUBLANE = 8                            # f32 sublane packing (x streamed as f32)
TB_HARD_MAX = 8192                     # absolute cap on batch-tile rows
VMEM_TILE_BUDGET = 20 * 1024 * 1024    # bytes budgeted for per-tile buffers
VMEM_LIMIT = 32 * 1024 * 1024          # scoped VMEM limit (safe on v7x's 64 MiB)


def _round_up(n, m):
    return ((n + m - 1) // m) * m


def _cdiv(a, b):
    return -(-a // b)


def _choose_batch_tile(b_pad0, D, hidden, n_out):
    """Pick batch-tile rows from a per-row VMEM byte estimate."""
    per_row = (2 * D * 4               # double-buffered f32 x stream
               + 2 * n_out * 4         # double-buffered f32 output
               + D * 2                 # in-kernel bf16 copy of x
               + 2 * hidden * (4 + 2)  # h1/h2 f32 + bf16 copies
               + n_out * 4)            # logits
    tb_cap = max(SUBLANE, (VMEM_TILE_BUDGET // per_row) // SUBLANE * SUBLANE)
    tb_cap = min(tb_cap, TB_HARD_MAX)
    # v7x: keep >= 2 grid steps so ("parallel",) shards over both TensorCores.
    if b_pad0 >= 2 * SUBLANE:
        tb_cap = min(tb_cap, _round_up(_cdiv(b_pad0, 2), SUBLANE))
    # Balanced tiles: minimize zero-row padding for unlucky batch sizes.
    n_steps = _cdiv(b_pad0, tb_cap)
    tb = _round_up(_cdiv(b_pad0, n_steps), SUBLANE)
    return tb, n_steps


def mlp_kernel(x_ref, w1_ref, b1_ref, w2_ref, b2_ref, w3_ref, b3_ref, o_ref):
    # x streamed from HBM as f32; cast to bf16 in-kernel (MXU-native operands,
    # no separate wrapper-side cast pass over HBM).
    x = x_ref[...].astype(jnp.bfloat16)

    # mlp1 + relu (bf16 MXU operands, f32 accumulate / VPU math)
    h1 = jnp.dot(x, w1_ref[...], preferred_element_type=jnp.float32) + b1_ref[...]
    h1 = jnp.maximum(h1, 0.0)

    # dropout: identity in eval/inference mode
    # TODO(synk): train-mode dropout (RNG masking) not implemented.

    # mlp2 + relu
    h2 = jnp.dot(h1.astype(jnp.bfloat16), w2_ref[...],
                 preferred_element_type=jnp.float32) + b2_ref[...]
    h2 = jnp.maximum(h2, 0.0)

    # mlp3: class axis kept at its natural width (no lane padding), so no
    # in-kernel mask is needed and the HBM writeback is n_classes*4 B/row.
    logits = jnp.dot(h2.astype(jnp.bfloat16), w3_ref[...],
                     preferred_element_type=jnp.float32) + b3_ref[...]

    # numerically stable softmax along the class axis (PyTorch dim=1)
    m = jnp.max(logits, axis=-1, keepdims=True)
    e = jnp.exp(logits - m)
    denom = jnp.sum(e, axis=-1, keepdims=True)
    o_ref[...] = (e * pl.reciprocal(denom, approx=False)).astype(o_ref.dtype)


def mlp_forward(x, params):
    """x: (B, S, F) float32.  Returns (B, n_classes) softmax allocations."""
    B = x.shape[0]
    D = x.shape[1] * x.shape[2]

    w1, b1, w2, b2, w3, b3 = params
    hidden = w1.shape[1]
    n_classes = w3.shape[1]

    # --- tiling: pad batch to SUBLANE, then to a multiple of the chosen tile ---
    b_pad0 = _round_up(max(B, 1), SUBLANE)
    tb, n_steps = _choose_batch_tile(b_pad0, D, hidden, n_classes)
    b_pad = n_steps * tb

    x_flat = x.reshape(B, D).astype(jnp.float32)     # keep f32; cast in-kernel
    if b_pad != B:
        x_flat = jnp.pad(x_flat, ((0, b_pad - B), (0, 0)))

    w1b = w1.astype(jnp.bfloat16)
    w2b = w2.astype(jnp.bfloat16)
    w3b = w3.astype(jnp.bfloat16)
    b1f = b1.astype(jnp.float32).reshape(1, hidden)
    b2f = b2.astype(jnp.float32).reshape(1, hidden)
    b3f = b3.astype(jnp.float32).reshape(1, n_classes)

    out_padded = pl.pallas_call(
        mlp_kernel,
        out_shape=jax.ShapeDtypeStruct((b_pad, n_classes), jnp.float32),
        grid=(n_steps,),
        in_specs=[
            pl.BlockSpec((tb, D), lambda i: (i, 0)),        # streamed x tiles
            pl.BlockSpec(w1b.shape, lambda i: (0, 0)),      # VMEM-resident weights
            pl.BlockSpec(b1f.shape, lambda i: (0, 0)),
            pl.BlockSpec(w2b.shape, lambda i: (0, 0)),
            pl.BlockSpec(b2f.shape, lambda i: (0, 0)),
            pl.BlockSpec(w3b.shape, lambda i: (0, 0)),
            pl.BlockSpec(b3f.shape, lambda i: (0, 0)),
        ],
        out_specs=pl.BlockSpec((tb, n_classes), lambda i: (i, 0)),
        compiler_params=pltpu.CompilerParams(
            dimension_semantics=("parallel",),
            vmem_limit_bytes=VMEM_LIMIT,
        ),
    )(x_flat, w1b, b1f, w2b, b2f, w3b, b3f)

    if b_pad != B:
        out_padded = out_padded[:B]     # only batch padding remains to trim
    return out_padded


def init_params(key, flattened_input_size, hidden_dim=64, n_classes=30):
    """PyTorch-Linear-style init: U(-1/sqrt(fan_in), 1/sqrt(fan_in)).
    Weights are stored transposed, i.e. (in_features, out_features)."""
    def linear(k, fan_in, fan_out):
        kw, kb = jax.random.split(k)
        bound = 1.0 / jnp.sqrt(fan_in)
        w = jax.random.uniform(kw, (fan_in, fan_out), jnp.float32, -bound, bound)
        b = jax.random.uniform(kb, (1, fan_out), jnp.float32, -bound, bound)
        return w, b

    k1, k2, k3 = jax.random.split(key, 3)
    w1, b1 = linear(k1, flattened_input_size, hidden_dim)
    w2, b2 = linear(k2, hidden_dim, hidden_dim)
    w3, b3 = linear(k3, hidden_dim, n_classes)
    return (w1, b1, w2, b2, w3, b3)


def mlp_reference(x, params):
    """Pure-JAX f32 reference of the PyTorch forward (eval mode)."""
    w1, b1, w2, b2, w3, b3 = params
    B = x.shape[0]
    xf = x.reshape(B, -1)
    h = jnp.maximum(xf @ w1 + b1, 0.0)
    h = jnp.maximum(h @ w2 + b2, 0.0)
    logits = h @ w3 + b3
    return jax.nn.softmax(logits, axis=1)


if __name__ == "__main__":
    # input_shape = (seq=8, features=16) -> flattened_input_size = 128
    B, S, F = 2, 8, 16
    HIDDEN = 32
    N_CLASSES = 30

    key = jax.random.PRNGKey(0)
    kx, kp = jax.random.split(key)
    x = jax.random.normal(kx, (B, S, F), dtype=jnp.float32)
    params = init_params(kp, S * F, hidden_dim=HIDDEN, n_classes=N_CLASSES)

    out = mlp_forward(x, params)
    out = jax.block_until_ready(out)

    ref = mlp_reference(x, params)
    assert out.shape == (B, N_CLASSES)
    # bf16 matmul operands -> looser tolerance than pure f32
    assert jnp.allclose(out, ref, atol=1e-2), "mismatch vs reference"
    assert jnp.allclose(jnp.sum(out, axis=1), 1.0, atol=1e-3), "softmax rows must sum to 1"

    print("KERNEL_OK")
</pallas_src>

<mosaic_0001>
module attributes {stable_mosaic.version = 11 : i64} {
  func.func @mlp_kernel(%arg0: i32, %arg1: memref<8x128xf32, #tpu.memory_space<vmem>>, %arg2: memref<128x32xbf16, #tpu.memory_space<vmem>>, %arg3: memref<1x32xf32, #tpu.memory_space<vmem>>, %arg4: memref<32x32xbf16, #tpu.memory_space<vmem>>, %arg5: memref<1x32xf32, #tpu.memory_space<vmem>>, %arg6: memref<32x30xbf16, #tpu.memory_space<vmem>>, %arg7: memref<1x30xf32, #tpu.memory_space<vmem>>, %arg8: memref<8x30xf32, #tpu.memory_space<vmem>>) attributes {dimension_semantics = [#tpu.dimension_semantics<parallel>], iteration_bounds = array<i64: 1>, scalar_prefetch = 0 : i64, scratch_operands = 0 : i64, tpu.core_type = #tpu.core_type<tc>, window_params = [{transform_indices = @transform_0, window_bounds = array<i64: 8, 128>}, {pipeline_mode = #tpu.pipeline_mode<synchronous>, transform_indices = @transform_1, window_bounds = array<i64: 128, 32>}, {pipeline_mode = #tpu.pipeline_mode<synchronous>, transform_indices = @transform_2, window_bounds = array<i64: 1, 32>}, {pipeline_mode = #tpu.pipeline_mode<synchronous>, transform_indices = @transform_3, window_bounds = array<i64: 32, 32>}, {pipeline_mode = #tpu.pipeline_mode<synchronous>, transform_indices = @transform_4, window_bounds = array<i64: 1, 32>}, {pipeline_mode = #tpu.pipeline_mode<synchronous>, transform_indices = @transform_5, window_bounds = array<i64: 32, 30>}, {pipeline_mode = #tpu.pipeline_mode<synchronous>, transform_indices = @transform_6, window_bounds = array<i64: 1, 30>}, {transform_indices = @transform_7, window_bounds = array<i64: 8, 30>}]} {
    %c0 = arith.constant 0 : index
    %c0_0 = arith.constant 0 : index
    %0 = vector.load %arg1[%c0, %c0_0] : memref<8x128xf32, #tpu.memory_space<vmem>>, vector<8x128xf32>
    %1 = arith.truncf %0 : vector<8x128xf32> to vector<8x128xbf16>
    %c0_1 = arith.constant 0 : index
    %c0_2 = arith.constant 0 : index
    %2 = vector.load %arg2[%c0_1, %c0_2] : memref<128x32xbf16, #tpu.memory_space<vmem>>, vector<128x32xbf16>
    %cst = arith.constant dense<0.000000e+00> : vector<8x32xf32>
    %3 = tpu.matmul %1, %2, %cst {dimension_numbers = #tpu.dot_dimension_numbers<[1], [0], [0], [1], [0, 0, 1, 1], [], []>} : vector<8x128xbf16>, vector<128x32xbf16>, vector<8x32xf32> -> vector<8x32xf32>
    %c0_3 = arith.constant 0 : index
    %c0_4 = arith.constant 0 : index
    %4 = vector.load %arg3[%c0_3, %c0_4] : memref<1x32xf32, #tpu.memory_space<vmem>>, vector<1x32xf32>
    %5 = vector.broadcast %4 : vector<1x32xf32> to vector<8x32xf32>
    %6 = arith.addf %3, %5 : vector<8x32xf32>
    %cst_5 = arith.constant 0.000000e+00 : f32
    %7 = vector.broadcast %cst_5 : f32 to vector<8x32xf32>
    %8 = arith.maximumf %6, %7 : vector<8x32xf32>
    %9 = arith.truncf %8 : vector<8x32xf32> to vector<8x32xbf16>
    %c0_6 = arith.constant 0 : index
    %c0_7 = arith.constant 0 : index
    %10 = vector.load %arg4[%c0_6, %c0_7] : memref<32x32xbf16, #tpu.memory_space<vmem>>, vector<32x32xbf16>
    %cst_8 = arith.constant dense<0.000000e+00> : vector<8x32xf32>
    %11 = tpu.matmul %9, %10, %cst_8 {dimension_numbers = #tpu.dot_dimension_numbers<[1], [0], [0], [1], [0, 0, 1, 1], [], []>} : vector<8x32xbf16>, vector<32x32xbf16>, vector<8x32xf32> -> vector<8x32xf32>
    %c0_9 = arith.constant 0 : index
    %c0_10 = arith.constant 0 : index
    %12 = vector.load %arg5[%c0_9, %c0_10] : memref<1x32xf32, #tpu.memory_space<vmem>>, vector<1x32xf32>
    %13 = vector.broadcast %12 : vector<1x32xf32> to vector<8x32xf32>
    %14 = arith.addf %11, %13 : vector<8x32xf32>
    %cst_11 = arith.constant 0.000000e+00 : f32
    %15 = vector.broadcast %cst_11 : f32 to vector<8x32xf32>
    %16 = arith.maximumf %14, %15 : vector<8x32xf32>
    %17 = arith.truncf %16 : vector<8x32xf32> to vector<8x32xbf16>
    %c0_12 = arith.constant 0 : index
    %c0_13 = arith.constant 0 : index
    %18 = vector.load %arg6[%c0_12, %c0_13] : memref<32x30xbf16, #tpu.memory_space<vmem>>, vector<32x30xbf16>
    %cst_14 = arith.constant dense<0.000000e+00> : vector<8x30xf32>
    %19 = tpu.matmul %17, %18, %cst_14 {dimension_numbers = #tpu.dot_dimension_numbers<[1], [0], [0], [1], [0, 0, 1, 1], [], []>} : vector<8x32xbf16>, vector<32x30xbf16>, vector<8x30xf32> -> vector<8x30xf32>
    %c0_15 = arith.constant 0 : index
    %c0_16 = arith.constant 0 : index
    %20 = vector.load %arg7[%c0_15, %c0_16] : memref<1x30xf32, #tpu.memory_space<vmem>>, vector<1x30xf32>
    %21 = vector.broadcast %20 : vector<1x30xf32> to vector<8x30xf32>
    %22 = arith.addf %19, %21 : vector<8x30xf32>
    %cst_17 = arith.constant dense<0xFF800000> : vector<8xf32>
    %23 = vector.multi_reduction <maximumf>, %22, %cst_17 [1] : vector<8x30xf32> to vector<8xf32>
    %24 = vector.shape_cast %23 : vector<8xf32> to vector<8x1xf32>
    %25 = vector.broadcast %24 : vector<8x1xf32> to vector<8x30xf32>
    %26 = arith.subf %22, %25 : vector<8x30xf32>
    %27 = math.exp %26 : vector<8x30xf32>
    %cst_18 = arith.constant dense<0.000000e+00> : vector<8xf32>
    %28 = vector.multi_reduction <add>, %27, %cst_18 [1] : vector<8x30xf32> to vector<8xf32>
    %29 = vector.shape_cast %28 : vector<8xf32> to vector<8x1xf32>
    %30 = tpu.reciprocal %29 : vector<8x1xf32> -> vector<8x1xf32>
    %31 = vector.broadcast %30 : vector<8x1xf32> to vector<8x30xf32>
    %32 = arith.mulf %27, %31 : vector<8x30xf32>
    %c0_19 = arith.constant 0 : index
    %c0_20 = arith.constant 0 : index
    %33 = vector.load %arg8[%c0_19, %c0_20] : memref<8x30xf32, #tpu.memory_space<vmem>>, vector<8x30xf32>
    tpu.vector_store %arg8[%c0_19, %c0_20], %32 {strides = array<i32>} : memref<8x30xf32, #tpu.memory_space<vmem>>, vector<8x30xf32>,
    return
  }
  func.func @transform_0(%arg0: i32) -> (i32, i32) {
    %c0_i32 = arith.constant 0 : i32
    %c0_i32_0 = arith.constant 0 : i32
    return %arg0, %c0_i32 : i32, i32
  }
  func.func @transform_1(%arg0: i32) -> (i32, i32) {
    %c0_i32 = arith.constant 0 : i32
    %c0_i32_0 = arith.constant 0 : i32
    %c0_i32_1 = arith.constant 0 : i32
    return %c0_i32, %c0_i32_0 : i32, i32
  }
  func.func @transform_2(%arg0: i32) -> (i32, i32) {
    %c0_i32 = arith.constant 0 : i32
    %c0_i32_0 = arith.constant 0 : i32
    %c0_i32_1 = arith.constant 0 : i32
    return %c0_i32, %c0_i32_0 : i32, i32
  }
  func.func @transform_3(%arg0: i32) -> (i32, i32) {
    %c0_i32 = arith.constant 0 : i32
    %c0_i32_0 = arith.constant 0 : i32
    %c0_i32_1 = arith.constant 0 : i32
    return %c0_i32, %c0_i32_0 : i32, i32
  }
  func.func @transform_4(%arg0: i32) -> (i32, i32) {
    %c0_i32 = arith.constant 0 : i32
    %c0_i32_0 = arith.constant 0 : i32
    %c0_i32_1 = arith.constant 0 : i32
    return %c0_i32, %c0_i32_0 : i32, i32
  }
  func.func @transform_5(%arg0: i32) -> (i32, i32) {
    %c0_i32 = arith.constant 0 : i32
    %c0_i32_0 = arith.constant 0 : i32
    %c0_i32_1 = arith.constant 0 : i32
    return %c0_i32, %c0_i32_0 : i32, i32
  }
  func.func @transform_6(%arg0: i32) -> (i32, i32) {
    %c0_i32 = arith.constant 0 : i32
    %c0_i32_0 = arith.constant 0 : i32
    %c0_i32_1 = arith.constant 0 : i32
    return %c0_i32, %c0_i32_0 : i32, i32
  }
  func.func @transform_7(%arg0: i32) -> (i32, i32) {
    %c0_i32 = arith.constant 0 : i32
    %c0_i32_0 = arith.constant 0 : i32
    return %arg0, %c0_i32 : i32, i32
  }
}

</mosaic_0001>

<llo_original>
// kernel: tpu_custom_call.1
$region0: #{tpu_custom_call.1}
  #allocation0 [shape = 'u32[]', space=smem, size = 0x4, offset = 0x4, fixed_abs, tag = 'smem constant byte address 0x4 - core index']
  #allocation1 [shape = 'u32[144,128]{1,0:T(1,128)}', space=vmem, size = 0x12000, scoped, tag = 'internal scratch']
  %s0 = inlined_call_operand.vmem [shape: f32[8,128], index: 0, kind: input, shape index: {}]
  %s1 = inlined_call_operand.vmem [shape: bf16[128,32], index: 1, kind: input, shape index: {}]
  %s2 = inlined_call_operand.vmem [shape: f32[1,32], index: 2, kind: input, shape index: {}]
  %s3 = inlined_call_operand.vmem [shape: bf16[32,32], index: 3, kind: input, shape index: {}]
  %s4 = inlined_call_operand.vmem [shape: f32[1,32], index: 4, kind: input, shape index: {}]
  %s5 = inlined_call_operand.vmem [shape: bf16[32,30], index: 5, kind: input, shape index: {}]
  %s6 = inlined_call_operand.vmem [shape: f32[1,30], index: 6, kind: input, shape index: {}]
  %s7 = inlined_call_operand.hbm [shape: f32[8,30], index: 7, kind: output, shape index: {}]
  %s8 = sld [smem:[#allocation0]]
  $region38: #{tpu_custom_call.1} parent=0
    _
  %s10 = ssub.s32 1, %s8
  %s11 = scalar_select 0, %s10, %s8
  $region1: #{tpu_custom_call.1} parent=0
    #allocation2 [shape = 'u8[4096]{0}', space=vmem, size = 0x1000, scoped, tag = 'output window, operand 0, single buffered']
    #allocation3 [shape = 's32[1]{0}', space=sflag, size = 0x4, scoped, tag = 'scoped memory for tpu_custom_call.1']
    %12 = vsyncpa [#allocation3], 0
    // Predicated region
    $region2: #{tpu_custom_call.1} parent=1 // pred_check
      _
    $region3: #{tpu_custom_call.1} parent=1 // pred_check_branch
      %14 = sbr.rel (0) target = $region5
    $region4: #{tpu_custom_call.1} parent=1 // pred_region
      _
    $region5: #{tpu_custom_call.1} parent=1 // pred_fallthru
      _
    // Predicated region
    $region6: #{tpu_custom_call.1} parent=1 // pred_check
      _
    $region7: #{tpu_custom_call.1} parent=1 // pred_check_branch
      %16 = sbr.rel (0) target = $region9
    $region8: #{tpu_custom_call.1} parent=1 // pred_region
      _
    $region9: #{tpu_custom_call.1} parent=1 // pred_fallthru
      _
    // Predicated region
    $region10: #{tpu_custom_call.1} parent=1 // pred_check
      _
    $region11: #{tpu_custom_call.1} parent=1 // pred_check_branch
      %18 = sbr.rel (0) target = $region13
    $region12: #{tpu_custom_call.1} parent=1 // pred_region
      _
    $region13: #{tpu_custom_call.1} parent=1 // pred_fallthru
      _
    // Predicated region
    $region14: #{tpu_custom_call.1} parent=1 // pred_check
      _
    $region15: #{tpu_custom_call.1} parent=1 // pred_check_branch
      %20 = sbr.rel (0) target = $region17
    $region16: #{tpu_custom_call.1} parent=1 // pred_region
      _
    $region17: #{tpu_custom_call.1} parent=1 // pred_fallthru
      _
    // Predicated region
    $region18: #{tpu_custom_call.1} parent=1 // pred_check
      _
    $region19: #{tpu_custom_call.1} parent=1 // pred_check_branch
      %22 = sbr.rel (0) target = $region21
    $region20: #{tpu_custom_call.1} parent=1 // pred_region
      _
    $region21: #{tpu_custom_call.1} parent=1 // pred_fallthru
      _
    // Predicated region
    $region22: #{tpu_custom_call.1} parent=1 // pred_check
      _
    $region23: #{tpu_custom_call.1} parent=1 // pred_check_branch
      %24 = sbr.rel (0) target = $region25
    $region24: #{tpu_custom_call.1} parent=1 // pred_region
      _
    $region25: #{tpu_custom_call.1} parent=1 // pred_fallthru
      _
    // Predicated region
    $region26: #{tpu_custom_call.1} parent=1 // pred_check
      _
    $region27: #{tpu_custom_call.1} parent=1 // pred_check_branch
      %26 = sbr.rel (0) target = $region29
    $region28: #{tpu_custom_call.1} parent=1 // pred_region
      _
    $region29: #{tpu_custom_call.1} parent=1 // pred_fallthru
      _
    %v28 = vld [vmem:[%s0] sm:$0xff]
    %v29 = vpack.c.bf16 %v28, %v28
    %v30 = vld [vmem:[%s1] sm:$0xf]
    %v31 = vld [vmem:[%s1 + $0x4] sm:$0xf]
    %v32 = vld [vmem:[%s1 + $0x8] sm:$0xf]
    %v33 = vld [vmem:[%s1 + $0xc] sm:$0xf]
    %v34 = vld [vmem:[%s1 + $0x10] sm:$0xf]
    %v35 = vld [vmem:[%s1 + $0x14] sm:$0xf]
    %v36 = vld [vmem:[%s1 + $0x18] sm:$0xf]
    %v37 = vld [vmem:[%s1 + $0x1c] sm:$0xf]
    %v38 = vld [vmem:[%s1 + $0x20] sm:$0xf]
    %v39 = vld [vmem:[%s1 + $0x24] sm:$0xf]
    %v40 = vld [vmem:[%s1 + $0x28] sm:$0xf]
    %v41 = vld [vmem:[%s1 + $0x2c] sm:$0xf]
    %v42 = vld [vmem:[%s1 + $0x30] sm:$0xf]
    %v43 = vld [vmem:[%s1 + $0x34] sm:$0xf]
    %v44 = vld [vmem:[%s1 + $0x38] sm:$0xf]
    %v45 = vld [vmem:[%s1 + $0x3c] sm:$0xf]
    %v46 = vld [vmem:[%s2] sm:$0x1]
    %v48 = vlaneseq
    %v49 = vshrl.u32 %v48, 7
    %v50 = vsub.s32 0, %v49
    %v51 = vrot.slane %v46, %v50
    %v69 = vunpack.c.l.b16 %v30
    %v70 = vunpack.c.l.b16 %v31
    %v71 = vunpack.c.l.b16 %v32
    %v72 = vunpack.c.l.b16 %v33
    %v73 = vunpack.c.l.b16 %v34
    %v74 = vunpack.c.l.b16 %v35
    %v75 = vunpack.c.l.b16 %v36
    %v76 = vunpack.c.l.b16 %v37
    %v77 = vunpack.c.l.b16 %v38
    %v78 = vunpack.c.l.b16 %v39
    %v79 = vunpack.c.l.b16 %v40
    %v80 = vunpack.c.l.b16 %v41
    %v81 = vunpack.c.l.b16 %v42
    %v82 = vunpack.c.l.b16 %v43
    %v83 = vunpack.c.l.b16 %v44
    %v84 = vunpack.c.l.b16 %v45
    %v85 = vpack.c.b16 %v70, %v69
    %v86 = vpack.c.b16 %v72, %v71
    %v87 = vpack.c.b16 %v74, %v73
    %v88 = vpack.c.b16 %v76, %v75
    %v89 = vpack.c.b16 %v78, %v77
    %v90 = vpack.c.b16 %v80, %v79
    %v91 = vpack.c.b16 %v82, %v81
    %v92 = vpack.c.b16 %v84, %v83
    %101 = vmatprep.subr.bf16.mxu0 0
    %102 = vmatpush1.bf16.msra.mxu0 %v85
    %103 = vmatprep.subr.bf16.mxu0 0
    %104 = vmatpush1.bf16.msra.mxu0 %v86
    %105 = vmatprep.subr.bf16.mxu0 0
    %106 = vmatpush1.bf16.msra.mxu0 %v87
    %107 = vmatprep.subr.bf16.mxu0 0
    %108 = vmatpush1.bf16.msra.mxu0 %v88
    %109 = vmatprep.subr.bf16.mxu0 0
    %110 = vmatpush1.bf16.msra.mxu0 %v89
    %111 = vmatprep.subr.bf16.mxu0 0
    %112 = vmatpush1.bf16.msra.mxu0 %v90
    %113 = vmatprep.subr.bf16.mxu0 0
    %114 = vmatpush1.bf16.msra.mxu0 %v91
    %115 = vmatprep.subr.bf16.mxu0 0
    %116 = vmatpush1.bf16.msra.mxu0 %v92
    %117 = vmatprep.subr.bf16.mxu0 0
    %118 = vmatpush1.bf16.msra.mxu0 0
    %119 = vmatprep.subr.bf16.mxu0 0
    %120 = vmatpush1.bf16.msra.mxu0 0
    %121 = vmatprep.subr.bf16.mxu0 0
    %122 = vmatpush1.bf16.msra.mxu0 0
    %123 = vmatprep.subr.bf16.mxu0 0
    %124 = vmatpush1.bf16.msra.mxu0 0
    %125 = vmatprep.subr.bf16.mxu0 0
    %126 = vmatpush1.bf16.msra.mxu0 0
    %127 = vmatprep.subr.bf16.mxu0 0
    %128 = vmatpush1.bf16.msra.mxu0 0
    %129 = vmatprep.subr.bf16.mxu0 0
    %130 = vmatpush1.bf16.msra.mxu0 0
    %131 = vmatprep.subr.bf16.mxu0 0
    %132 = vmatpush1.bf16.msra.mxu0 0
    %133 = vmatprep.mubr.bf16.mxu0 0
    %134 = vmatmul.mubr.bf16.gmra.mrb[0].mxu0 %v29
    %v135 = vpop.f32.mrb[0].mxu0
    %v136 = vadd.f32 %v51, %v135
    %v137 = vpop.f32.mrb[0].mxu0
    %v138 = vpop.f32.mrb[0].mxu0
    %v139 = vpop.f32.mrb[0].mxu0
    %140 = vdwg.mxu0
    %v141 = vmax.f32 %v136, 0.0
    %v142 = vpack.c.bf16 %v141, %v141
    %v143 = vld [vmem:[%s3] sm:$0xf]
    %v144 = vld [vmem:[%s3 + $0x4] sm:$0xf]
    %v145 = vld [vmem:[%s3 + $0x8] sm:$0xf]
    %v146 = vld [vmem:[%s3 + $0xc] sm:$0xf]
    %v147 = vld [vmem:[%s4] sm:$0x1]
    %v149 = vlaneseq
    %v150 = vshrl.u32 %v149, 7
    %v151 = vsub.s32 0, %v150
    %v152 = vrot.slane %v147, %v151
    %v158 = vunpack.c.l.b16 %v143
    %v159 = vunpack.c.l.b16 %v144
    %v160 = vunpack.c.l.b16 %v145
    %v161 = vunpack.c.l.b16 %v146
    %v162 = vpack.c.b16 %v159, %v158
    %v163 = vpack.c.b16 %v161, %v160
    %vm166 = vcmask 261120
    %v168 = vsel %vm166, %v142, 0
    %170 = vmatprep.subr.bf16.mxu0 0
    %171 = vmatpush1.bf16.msra.mxu0 %v162
    %172 = vmatprep.subr.bf16.mxu0 0
    %173 = vmatpush1.bf16.msra.mxu0 %v163
    %174 = vmatprep.subr.bf16.mxu0 0
    %175 = vmatpush1.bf16.msra.mxu0 0
    %176 = vmatprep.subr.bf16.mxu0 0
    %177 = vmatpush1.bf16.msra.mxu0 0
    %178 = vmatprep.subr.bf16.mxu0 0
    %179 = vmatpush1.bf16.msra.mxu0 0
    %180 = vmatprep.subr.bf16.mxu0 0
    %181 = vmatpush1.bf16.msra.mxu0 0
    %182 = vmatprep.subr.bf16.mxu0 0
    %183 = vmatpush1.bf16.msra.mxu0 0
    %184 = vmatprep.subr.bf16.mxu0 0
    %185 = vmatpush1.bf16.msra.mxu0 0
    %186 = vmatprep.subr.bf16.mxu0 0
    %187 = vmatpush1.bf16.msra.mxu0 0
    %188 = vmatprep.subr.bf16.mxu0 0
    %189 = vmatpush1.bf16.msra.mxu0 0
    %190 = vmatprep.subr.bf16.mxu0 0
    %191 = vmatpush1.bf16.msra.mxu0 0
    %192 = vmatprep.subr.bf16.mxu0 0
    %193 = vmatpush1.bf16.msra.mxu0 0
    %194 = vmatprep.subr.bf16.mxu0 0
    %195 = vmatpush1.bf16.msra.mxu0 0
    %196 = vmatprep.subr.bf16.mxu0 0
    %197 = vmatpush1.bf16.msra.mxu0 0
    %198 = vmatprep.subr.bf16.mxu0 0
    %199 = vmatpush1.bf16.msra.mxu0 0
    %200 = vmatprep.subr.bf16.mxu0 0
    %201 = vmatpush1.bf16.msra.mxu0 0
    %202 = vmatprep.mubr.bf16.mxu0 0
    %203 = vmatmul.mubr.bf16.gmra.mrb[0].mxu0 %v168
    %v204 = vpop.f32.mrb[0].mxu0
    %v205 = vadd.f32 %v152, %v204
    %v206 = vpop.f32.mrb[0].mxu0
    %v207 = vpop.f32.mrb[0].mxu0
    %v208 = vpop.f32.mrb[0].mxu0
    %209 = vdwg.mxu0
    %v210 = vmax.f32 %v205, 0.0
    %v211 = vpack.c.bf16 %v210, %v210
    %v212 = vld [vmem:[%s5] sm:$0xf]
    %v213 = vld [vmem:[%s5 + $0x4] sm:$0xf]
    %v214 = vld [vmem:[%s5 + $0x8] sm:$0xf]
    %v215 = vld [vmem:[%s5 + $0xc] sm:$0xf]
    %v216 = vld [vmem:[%s6] sm:$0x1]
    %v218 = vlaneseq
    %v219 = vshrl.u32 %v218, 7
    %v220 = vsub.s32 0, %v219
    %v221 = vrot.slane %v216, %v220
    %v227 = vunpack.c.l.b16 %v212
    %v228 = vunpack.c.l.b16 %v213
    %v229 = vunpack.c.l.b16 %v214
    %v230 = vunpack.c.l.b16 %v215
    %v231 = vpack.c.b16 %v228, %v227
    %v232 = vpack.c.b16 %v230, %v229
    %v236 = vsel %vm166, %v211, 0
    %238 = vmatprep.subr.bf16.mxu0 0
    %239 = vmatpush1.bf16.msra.mxu0 %v231
    %240 = vmatprep.subr.bf16.mxu0 0
    %241 = vmatpush1.bf16.msra.mxu0 %v232
    %242 = vmatprep.subr.bf16.mxu0 0
    %243 = vmatpush1.bf16.msra.mxu0 0
    %244 = vmatprep.subr.bf16.mxu0 0
    %245 = vmatpush1.bf16.msra.mxu0 0
    %246 = vmatprep.subr.bf16.mxu0 0
    %247 = vmatpush1.bf16.msra.mxu0 0
    %248 = vmatprep.subr.bf16.mxu0 0
    %249 = vmatpush1.bf16.msra.mxu0 0
    %250 = vmatprep.subr.bf16.mxu0 0
    %251 = vmatpush1.bf16.msra.mxu0 0
    %252 = vmatprep.subr.bf16.mxu0 0
    %253 = vmatpush1.bf16.msra.mxu0 0
    %254 = vmatprep.subr.bf16.mxu0 0
    %255 = vmatpush1.bf16.msra.mxu0 0
    %256 = vmatprep.subr.bf16.mxu0 0
    %257 = vmatpush1.bf16.msra.mxu0 0
    %258 = vmatprep.subr.bf16.mxu0 0
    %259 = vmatpush1.bf16.msra.mxu0 0
    %260 = vmatprep.subr.bf16.mxu0 0
    %261 = vmatpush1.bf16.msra.mxu0 0
    %262 = vmatprep.subr.bf16.mxu0 0
    %263 = vmatpush1.bf16.msra.mxu0 0
    %264 = vmatprep.subr.bf16.mxu0 0
    %265 = vmatpush1.bf16.msra.mxu0 0
    %266 = vmatprep.subr.bf16.mxu0 0
    %267 = vmatpush1.bf16.msra.mxu0 0
    %268 = vmatprep.subr.bf16.mxu0 0
    %269 = vmatpush1.bf16.msra.mxu0 0
    %270 = vmatprep.mubr.bf16.mxu0 0
    %271 = vmatmul.mubr.bf16.gmra.mrb[0].mxu0 %v236
    %v272 = vpop.f32.mrb[0].mxu0
    %v273 = vadd.f32 %v221, %v272
    %v274 = vpop.f32.mrb[0].mxu0
    %v275 = vpop.f32.mrb[0].mxu0
    %v276 = vpop.f32.mrb[0].mxu0
    %277 = vdwg.mxu0
    %vm278 = vcmask 244736
    %v279 = vsel %vm278, %v273, -inf
    %280 = vmax.xlane.f32.xlu0 %v279
    %v281 = vpop.xlane.xlu0 %280
    %v282 = vsub.f32 %v273, %v281
    %v283 = vmul.f32 %v282, 1.442695
    %v284 = vpow.pop %v283
    %v285 = vsel %vm278, %v284, 0.0
    %286 = vadd.xlane.f32.xlu0 %v285
    %v287 = vpop.xlane.xlu0 %286
    %v288 = vrcp.pop %v287
    %v289 = vmul.f32 %v284, %v288
    %290 = vst.msk [vmem:[#allocation2] sm:$0xff] %vm278, %v289
    // Predicated region
    $region30: #{tpu_custom_call.1} parent=1 // pred_check
      _
    $region31: #{tpu_custom_call.1} parent=1 // pred_check_branch
      %292 = sbr.rel (0) target = $region33
    $region32: #{tpu_custom_call.1} parent=1 // pred_region
      %s294 = ssub.s32 128, 128
      %295 = vsyncadd [#allocation3], %s294
      %s297 = sshll.u32 [#allocation2], 4
      %s298 = int_to_ptr.vmem [resolvable:$true] %s297
      %300 = dma.vmem_to_hbm [thread:$0]  %s298, 128, %s7, [#allocation3]
    $region33: #{tpu_custom_call.1} parent=1 // pred_fallthru
      _
    // Predicated region
    $region34: #{tpu_custom_call.1} parent=1 // pred_check
      _
    $region35: #{tpu_custom_call.1} parent=1 // pred_check_branch
      %302 = sbr.rel (0) target = $region37
    $region36: #{tpu_custom_call.1} parent=1 // pred_region
      %303 = dma.done [#allocation3], 128
    $region37: #{tpu_custom_call.1} parent=1 // pred_fallthru
      _
    %304 = vsyncpa [#allocation3], 1

</llo_original>
